<compile_context>
chip_gen: v6e
topology: v6e:2x2x1
jax: 0.10.0
libtpu: 0.0.40
codegen_flags: <defaults>
</compile_context>

<pallas_src>
import jax
import jax.numpy as jnp
from jax.experimental import pallas as pl
from jax.experimental.pallas import tpu as pltpu


def _normalize_rgb_small_kernel(scale_ref, bias_ref, x_ref, o_ref):
    # Whole (C, H*W) slab in one step; scale/bias are (C, 1) f32 and broadcast
    # along lanes on the VPU.  mul+add instead of sub+divide.
    x = x_ref[...].astype(jnp.float32)
    o_ref[...] = (x * scale_ref[...] + bias_ref[...]).astype(o_ref.dtype)


def _normalize_rgb_tiled_kernel(scale_ref, bias_ref, x_ref, o_ref):
    # One grid step = one sublane/lane-dense (1, TH, W) slab of one channel.
    # scale/bias are (C,) f32 tables in SMEM; a scalar read indexed by
    # program_id splats for free (no per-step padded VMEM param DMAs).
    c = pl.program_id(1)
    x = x_ref[...].astype(jnp.float32)
    o_ref[...] = (x * scale_ref[c] + bias_ref[c]).astype(o_ref.dtype)


def normalize_rgb(image, mean, std, *, block_rows=None, block_bytes=4 << 20,
                  small_path_max_bytes=4 << 20, vmem_limit_bytes=48 << 20):
    """NormalizeRGB forward: normalize first len(mean) channels, pass the rest through.

    image: (C, H, W) float array with C >= len(mean). Returns same shape/dtype.
    """
    C, H, W = image.shape
    itemsize = image.dtype.itemsize

    # Per-channel parameters in float32 (precision-safe even for bf16/f16 images).
    mean = jnp.asarray(mean, dtype=jnp.float32)
    std = jnp.asarray(std, dtype=jnp.float32)
    n_rgb = mean.shape[0]
    if C < n_rgb:
        raise ValueError(f"image has {C} channels, expected at least {n_rgb}")
    # Identity on trailing (alpha, ...) channels: mean = 0, std = 1.
    mean_full = jnp.concatenate([mean, jnp.zeros((C - n_rgb,), jnp.float32)])
    std_full = jnp.concatenate([std, jnp.ones((C - n_rgb,), jnp.float32)])
    # Fold (x - mean) / std into x * scale + bias (drops the vector divide).
    scale = 1.0 / std_full
    bias = -mean_full / std_full

    total_bytes = C * H * W * itemsize

    # --- Fast path: one invocation over the whole image (fits VMEM easily). ---
    if total_bytes <= small_path_max_bytes:
        # The (C, H*W) reshape is a free bitcast for a contiguous CHW image.
        out2d = pl.pallas_call(
            _normalize_rgb_small_kernel,
            out_shape=jax.ShapeDtypeStruct((C, H * W), image.dtype),
        )(scale.reshape(C, 1), bias.reshape(C, 1), image.reshape(C, H * W))
        return out2d.reshape(C, H, W)

    # --- General path: grid over (spatial row-block, channel). ---
    # Blocks are 3-D (1, TH, W): second-minor dim TH is a multiple of 8 (or the
    # full H), last dim is the full W -> satisfies the (8,128) block rule and
    # keeps every vreg fully dense.  The image itself is never reshaped.
    # TODO(synk): extremely wide rows (8*W*itemsize >> block_bytes) would need an
    # additional 128-multiple tiling along W; not needed for typical images.
    if block_rows is None:
        block_rows = block_bytes // max(1, W * itemsize)
    if block_rows >= H:
        block_rows = H                                  # full extent is legal
    else:
        block_rows = max(8, (block_rows // 8) * 8)      # sublane-dense multiple of 8
    n_spatial = pl.cdiv(H, block_rows)

    out = pl.pallas_call(
        _normalize_rgb_tiled_kernel,
        out_shape=jax.ShapeDtypeStruct((C, H, W), image.dtype),
        grid_spec=pltpu.PrefetchScalarGridSpec(
            num_scalar_prefetch=0,
            # Spatial axis leads: on v7x the two TensorCores split the big axis
            # evenly; harmless on single-TC v5e/v6e.
            grid=(n_spatial, C),
            in_specs=[
                # (C,) f32 parameter tables, resident in SMEM for the whole grid.
                pl.BlockSpec(memory_space=pltpu.MemorySpace.SMEM),
                pl.BlockSpec(memory_space=pltpu.MemorySpace.SMEM),
                # dense (1, TH, W) slab of one channel plane per step.
                pl.BlockSpec((1, block_rows, W), lambda s, c: (c, s, 0)),
            ],
            out_specs=pl.BlockSpec((1, block_rows, W), lambda s, c: (c, s, 0)),
        ),
        compiler_params=pltpu.CompilerParams(
            dimension_semantics=("parallel", "parallel"),
            vmem_limit_bytes=vmem_limit_bytes,
        ),
    )(scale, bias, image)
    return out


if __name__ == "__main__":
    key = jax.random.PRNGKey(0)

    # Deterministic normalization parameters (ImageNet-style), set in-script.
    mean = jnp.array([0.485, 0.456, 0.406], dtype=jnp.float32)
    std = jnp.array([0.229, 0.224, 0.225], dtype=jnp.float32)

    def reference(img):
        return jnp.concatenate(
            [(img[:3] - mean[:, None, None]) / std[:, None, None], img[3:]],
            axis=0,
        )

    k1, k2, k3 = jax.random.split(key, 3)

    # 1) Tiny RGBA image -> single-step fast path.
    img_small = jax.random.uniform(k1, (4, 16, 16), dtype=jnp.float32)
    out_small = jax.block_until_ready(normalize_rgb(img_small, mean, std))
    assert out_small.shape == img_small.shape and out_small.dtype == img_small.dtype
    assert jnp.allclose(out_small, reference(img_small), atol=1e-5, rtol=1e-5)

    # 2) Image forced through the tiled (spatial x channel) path with 8-row
    #    blocks so several dense (1, 8, 128) slabs are exercised per channel.
    img_tiled = jax.random.uniform(k2, (4, 32, 128), dtype=jnp.float32)
    out_tiled = jax.block_until_ready(
        normalize_rgb(img_tiled, mean, std, block_rows=8, small_path_max_bytes=0))
    assert out_tiled.shape == img_tiled.shape and out_tiled.dtype == img_tiled.dtype
    assert jnp.allclose(out_tiled, reference(img_tiled), atol=1e-5, rtol=1e-5)

    # 3) Ragged case: C=3 (no alpha), H not a multiple of the row block (masked
    #    last block), W not a multiple of 128 (full-extent last dim).
    img_ragged = jax.random.uniform(k3, (3, 20, 96), dtype=jnp.float32)
    out_ragged = jax.block_until_ready(
        normalize_rgb(img_ragged, mean, std, block_rows=8, small_path_max_bytes=0))
    assert out_ragged.shape == img_ragged.shape and out_ragged.dtype == img_ragged.dtype
    assert jnp.allclose(out_ragged, reference(img_ragged), atol=1e-5, rtol=1e-5)

    print("KERNEL_OK")
</pallas_src>

<mosaic_0001>
module attributes {stable_mosaic.version = 11 : i64} {
  func.func @_normalize_rgb_small_kernel(%arg0: memref<4x1xf32, #tpu.memory_space<vmem>>, %arg1: memref<4x1xf32, #tpu.memory_space<vmem>>, %arg2: memref<4x256xf32, #tpu.memory_space<vmem>>, %arg3: memref<4x256xf32, #tpu.memory_space<vmem>>) attributes {dimension_semantics = [], scalar_prefetch = 0 : i64, scratch_operands = 0 : i64, tpu.core_type = #tpu.core_type<tc>} {
    %c0 = arith.constant 0 : index
    %c0_0 = arith.constant 0 : index
    %0 = vector.load %arg2[%c0, %c0_0] : memref<4x256xf32, #tpu.memory_space<vmem>>, vector<4x256xf32>
    %c0_1 = arith.constant 0 : index
    %c0_2 = arith.constant 0 : index
    %1 = vector.load %arg0[%c0_1, %c0_2] : memref<4x1xf32, #tpu.memory_space<vmem>>, vector<4x1xf32>
    %2 = vector.broadcast %1 : vector<4x1xf32> to vector<4x256xf32>
    %3 = arith.mulf %0, %2 : vector<4x256xf32>
    %c0_3 = arith.constant 0 : index
    %c0_4 = arith.constant 0 : index
    %4 = vector.load %arg1[%c0_3, %c0_4] : memref<4x1xf32, #tpu.memory_space<vmem>>, vector<4x1xf32>
    %5 = vector.broadcast %4 : vector<4x1xf32> to vector<4x256xf32>
    %6 = arith.addf %3, %5 : vector<4x256xf32>
    %c0_5 = arith.constant 0 : index
    %c0_6 = arith.constant 0 : index
    %7 = vector.load %arg3[%c0_5, %c0_6] : memref<4x256xf32, #tpu.memory_space<vmem>>, vector<4x256xf32>
    tpu.vector_store %arg3[%c0_5, %c0_6], %6 {strides = array<i32>} : memref<4x256xf32, #tpu.memory_space<vmem>>, vector<4x256xf32>,
    return
  }
}

</mosaic_0001>

<llo_original>
// kernel: tpu_custom_call.1
$region0: #{tpu_custom_call.1}
  #allocation0 [shape = 'u32[]', space=smem, size = 0x4, offset = 0x4, fixed_abs, tag = 'smem constant byte address 0x4 - core index']
  #allocation1 [shape = 'u32[144,128]{1,0:T(1,128)}', space=vmem, size = 0x12000, scoped, tag = 'internal scratch']
  %s0 = inlined_call_operand.vmem [shape: f32[4,1], index: 0, kind: input, shape index: {}]
  %s1 = inlined_call_operand.vmem [shape: f32[4,1], index: 1, kind: input, shape index: {}]
  %s2 = inlined_call_operand.vmem [shape: f32[4,256], index: 2, kind: input, shape index: {}]
  %s3 = inlined_call_operand.hbm [shape: f32[4,256], index: 3, kind: output, shape index: {}]
  %s4 = sld [smem:[#allocation0]]
  $region22: #{tpu_custom_call.1} parent=0
    _
  %s6 = ssub.s32 1, %s4
  %s7 = scalar_select 0, %s6, %s4
  $region1: #{tpu_custom_call.1} parent=0
    #allocation2 [shape = 'u8[4096]{0}', space=vmem, size = 0x1000, scoped, tag = 'output window, operand 0, single buffered']
    #allocation3 [shape = 's32[1]{0}', space=sflag, size = 0x4, scoped, tag = 'scoped memory for tpu_custom_call.1']
    %8 = vsyncpa [#allocation3], 0
    // Predicated region
    $region2: #{tpu_custom_call.1} parent=1 // pred_check
      _
    $region3: #{tpu_custom_call.1} parent=1 // pred_check_branch
      %10 = sbr.rel (0) target = $region5
    $region4: #{tpu_custom_call.1} parent=1 // pred_region
      _
    $region5: #{tpu_custom_call.1} parent=1 // pred_fallthru
      _
    // Predicated region
    $region6: #{tpu_custom_call.1} parent=1 // pred_check
      _
    $region7: #{tpu_custom_call.1} parent=1 // pred_check_branch
      %12 = sbr.rel (0) target = $region9
    $region8: #{tpu_custom_call.1} parent=1 // pred_region
      _
    $region9: #{tpu_custom_call.1} parent=1 // pred_fallthru
      _
    // Predicated region
    $region10: #{tpu_custom_call.1} parent=1 // pred_check
      _
    $region11: #{tpu_custom_call.1} parent=1 // pred_check_branch
      %14 = sbr.rel (0) target = $region13
    $region12: #{tpu_custom_call.1} parent=1 // pred_region
      _
    $region13: #{tpu_custom_call.1} parent=1 // pred_fallthru
      _
    %v15 = vld [vmem:[%s2] sm:$0xff]
    %v16 = vld [vmem:[%s0] sm:$0xf]
    %18 = vset.pattern.permute.xlu0 0
    %19 = vperm.xlu0 %18, %v16
    %v20 = vpop.permute.xlu0 %19
    %v22 = vunpack.c.l.s4 839922192
    %v23 = vunpack.c.0.s8 %v22
    %v24 = vlaneseq
    %v25 = vshrl.u32 %v24, 7
    %v26 = vsub.s32 %v23, %v25
    %v27 = vrot.slane %v20, %v26
    %v29 = vmul.f32 %v15, %v27
    %v30 = vld [vmem:[%s1] sm:$0xf]
    %32 = vset.pattern.permute.xlu0 0
    %33 = vperm.xlu0 %32, %v30
    %v34 = vpop.permute.xlu0 %33
    %v36 = vunpack.c.l.s4 839922192
    %v37 = vunpack.c.0.s8 %v36
    %v38 = vlaneseq
    %v39 = vshrl.u32 %v38, 7
    %v40 = vsub.s32 %v37, %v39
    %v41 = vrot.slane %v34, %v40
    %v43 = vadd.f32 %v29, %v41
    %44 = vst [vmem:[#allocation2] sm:$0xff] %v43
    // Predicated region
    $region14: #{tpu_custom_call.1} parent=1 // pred_check
      _
    $region15: #{tpu_custom_call.1} parent=1 // pred_check_branch
      %46 = sbr.rel (0) target = $region17
    $region16: #{tpu_custom_call.1} parent=1 // pred_region
      %s48 = ssub.s32 128, 128
      %49 = vsyncadd [#allocation3], %s48
      %s51 = sshll.u32 [#allocation2], 4
      %s52 = int_to_ptr.vmem [resolvable:$true] %s51
      %54 = dma.vmem_to_hbm [thread:$0]  %s52, 128, %s3, [#allocation3]
    $region17: #{tpu_custom_call.1} parent=1 // pred_fallthru
      _
    // Predicated region
    $region18: #{tpu_custom_call.1} parent=1 // pred_check
      _
    $region19: #{tpu_custom_call.1} parent=1 // pred_check_branch
      %56 = sbr.rel (0) target = $region21
    $region20: #{tpu_custom_call.1} parent=1 // pred_region
      %57 = dma.done [#allocation3], 128
    $region21: #{tpu_custom_call.1} parent=1 // pred_fallthru
      _
    %58 = vsyncpa [#allocation3], 1

</llo_original>
